<compile_context>
chip_gen: v7x
topology: tpu7x:2x2x1
jax: 0.10.0
libtpu: 0.0.40
codegen_flags: <defaults>
</compile_context>

<pallas_src>
import functools

import jax
import jax.numpy as jnp
from jax import lax
from jax.experimental import pallas as pl
from jax.experimental.pallas import tpu as pltpu


def _sdpa_kernel(q_ref, k_ref, v_ref, out_ref, attn_ref, logattn_ref, *,
                 inv_temperature):
    # Refs are 2-D: the leading batch dim is squeezed via pl.Squeezed().
    q = q_ref[...]                       # (TQ, D)   input dtype
    k = k_ref[...]                       # (Lk, D)   input dtype
    v = v_ref[...]                       # (Lk, Dv)  input dtype

    # Fold 1/temperature into q: O(TQ*D) multiplies instead of O(TQ*Lk).
    q_scaled = q * inv_temperature       # weak-typed, stays in q's dtype

    # scores = (q/T) @ k^T : contract last dims directly (no transpose),
    # MXU runs in the input dtype with f32 accumulation.
    s = lax.dot_general(
        q_scaled, k,
        dimension_numbers=(((1,), (1,)), ((), ())),
        preferred_element_type=jnp.float32)          # (TQ, Lk) f32

    # Numerically-stable softmax / log_softmax over the key axis, in f32.
    m = jnp.max(s, axis=-1, keepdims=True)
    s_shift = s - m
    e = jnp.exp(s_shift)
    denom = jnp.sum(e, axis=-1, keepdims=True)       # (TQ, 1)
    log_denom = jnp.log(denom)
    inv_denom = pl.reciprocal(denom, approx=False)   # exact per-row reciprocal
    attn = e * inv_denom
    log_attn = s_shift - log_denom

    # TODO(synk): attn_dropout=0.1 omitted (eval-mode identity); training-mode
    # dropout would need pltpu.prng_seed/prng_random_bits + rescaling here.

    # output = attn @ v : probabilities cast to v's dtype for the MXU fast
    # path, accumulate in f32.
    out = jnp.dot(attn.astype(v.dtype), v, preferred_element_type=jnp.float32)

    out_ref[...] = out.astype(out_ref.dtype)
    attn_ref[...] = attn.astype(attn_ref.dtype)
    logattn_ref[...] = log_attn.astype(logattn_ref.dtype)


def _choose_q_tile(Lq, max_tile):
    """Largest multiple-of-8 tile <= max_tile that divides Lq (else full Lq)."""
    if Lq <= max_tile:
        return Lq
    start = (min(max_tile, Lq) // 8) * 8
    for t in range(start, 7, -8):
        if Lq % t == 0:
            return t
    return Lq


def scaled_dot_product_attention(q, k, v, temperature, *, max_q_tile=256):
    """q: (B, Lq, D), k: (B, Lk, D), v: (B, Lk, Dv) -> (output, attn, log_attn)."""
    B, Lq, D = q.shape
    Bk, Lk, Dk = k.shape
    Bv, Lkv, Dv = v.shape
    assert D == Dk and Bk == B and Bv == B and Lkv == Lk

    TQ = _choose_q_tile(Lq, max_q_tile)
    n_q_tiles = Lq // TQ

    kernel = functools.partial(
        _sdpa_kernel, inv_temperature=1.0 / float(temperature))

    out_dtype = q.dtype
    out_shapes = (
        jax.ShapeDtypeStruct((B, Lq, Dv), out_dtype),   # output
        jax.ShapeDtypeStruct((B, Lq, Lk), out_dtype),   # attn
        jax.ShapeDtypeStruct((B, Lq, Lk), out_dtype),   # log_attn
    )

    in_item = jnp.dtype(q.dtype).itemsize
    out_item = jnp.dtype(out_dtype).itemsize

    # VMEM budget: double-buffered per-step tiles (q, out, attn, log_attn)
    # plus the k/v tiles that persist across the query-tile axis.
    per_step_bytes = 2 * (
        TQ * D * in_item            # q tile
        + Lk * D * in_item          # k tile
        + Lk * Dv * in_item         # v tile
        + TQ * Dv * out_item        # output tile
        + 2 * TQ * Lk * out_item    # attn + log_attn tiles
    )
    vmem_limit = int(min(64 * 1024 * 1024,
                         max(32 * 1024 * 1024, 2 * per_step_bytes)))

    cost = pl.CostEstimate(
        flops=2 * B * Lq * Lk * (D + Dv),
        transcendentals=B * Lq * Lk,    # exp over scores (log is per-row)
        bytes_accessed=(B * Lq * D + B * Lk * D + B * Lk * Dv) * in_item
                       + (B * Lq * Dv + 2 * B * Lq * Lk) * out_item,
    )

    grid_spec = pltpu.PrefetchScalarGridSpec(
        num_scalar_prefetch=0,
        grid=(B, n_q_tiles),
        in_specs=[
            pl.BlockSpec((pl.Squeezed(), TQ, D), lambda b, qi: (b, qi, 0)),
            # k/v: block index constant across the query-tile axis -> stay
            # VMEM-resident while a batch element's query tiles are processed.
            pl.BlockSpec((pl.Squeezed(), Lk, D), lambda b, qi: (b, 0, 0)),
            pl.BlockSpec((pl.Squeezed(), Lk, Dv), lambda b, qi: (b, 0, 0)),
        ],
        out_specs=[
            pl.BlockSpec((pl.Squeezed(), TQ, Dv), lambda b, qi: (b, qi, 0)),
            pl.BlockSpec((pl.Squeezed(), TQ, Lk), lambda b, qi: (b, qi, 0)),
            pl.BlockSpec((pl.Squeezed(), TQ, Lk), lambda b, qi: (b, qi, 0)),
        ],
    )

    return pl.pallas_call(
        kernel,
        out_shape=out_shapes,
        grid_spec=grid_spec,
        cost_estimate=cost,
        compiler_params=pltpu.CompilerParams(
            dimension_semantics=("parallel", "parallel"),
            vmem_limit_bytes=vmem_limit),
    )(q, k, v)


if __name__ == "__main__":
    # Small shapes consistent with the module's forward (bmm semantics).
    B, Lq, Lk, D, Dv = 2, 8, 8, 32, 32
    temperature = float(jnp.sqrt(jnp.float32(D)))  # typical: sqrt(d_k)

    key = jax.random.PRNGKey(0)
    kq, kk, kv = jax.random.split(key, 3)
    q = jax.random.normal(kq, (B, Lq, D), dtype=jnp.float32)
    k = jax.random.normal(kk, (B, Lk, D), dtype=jnp.float32)
    v = jax.random.normal(kv, (B, Lk, Dv), dtype=jnp.float32)

    output, attn, log_attn = scaled_dot_product_attention(q, k, v, temperature)
    jax.block_until_ready((output, attn, log_attn))

    # Lightweight correctness check against a plain-JAX reference.
    s_ref = jnp.einsum("bqd,bkd->bqk", q, k) / temperature
    attn_ref = jax.nn.softmax(s_ref, axis=2)
    log_attn_ref = jax.nn.log_softmax(s_ref, axis=2)
    out_ref = jnp.einsum("bqk,bkd->bqd", attn_ref, v)

    assert jnp.allclose(output, out_ref, atol=1e-5, rtol=1e-5)
    assert jnp.allclose(attn, attn_ref, atol=1e-5, rtol=1e-5)
    assert jnp.allclose(log_attn, log_attn_ref, atol=1e-5, rtol=1e-5)

    print("KERNEL_OK")
</pallas_src>

<mosaic_0001>
module attributes {stable_mosaic.version = 11 : i64} {
  func.func @_sdpa_kernel(%arg0: i32, %arg1: i32, %arg2: memref<1x8x32xf32, #tpu.memory_space<vmem>>, %arg3: memref<1x8x32xf32, #tpu.memory_space<vmem>>, %arg4: memref<1x8x32xf32, #tpu.memory_space<vmem>>, %arg5: memref<1x8x32xf32, #tpu.memory_space<vmem>>, %arg6: memref<1x8x8xf32, #tpu.memory_space<vmem>>, %arg7: memref<1x8x8xf32, #tpu.memory_space<vmem>>) attributes {dimension_semantics = [#tpu.dimension_semantics<parallel>, #tpu.dimension_semantics<parallel>], iteration_bounds = array<i64: 2, 1>, scalar_prefetch = 0 : i64, scratch_operands = 0 : i64, tpu.core_type = #tpu.core_type<tc>, window_params = [{transform_indices = @transform_0, window_bounds = array<i64: 1, 8, 32>}, {transform_indices = @transform_1, window_bounds = array<i64: 1, 8, 32>}, {transform_indices = @transform_2, window_bounds = array<i64: 1, 8, 32>}, {transform_indices = @transform_3, window_bounds = array<i64: 1, 8, 32>}, {transform_indices = @transform_4, window_bounds = array<i64: 1, 8, 8>}, {transform_indices = @transform_5, window_bounds = array<i64: 1, 8, 8>}]} {
    %c0 = arith.constant 0 : index
    %c0_0 = arith.constant 0 : index
    %c0_1 = arith.constant 0 : index
    %0 = vector.load %arg2[%c0, %c0_0, %c0_1] : memref<1x8x32xf32, #tpu.memory_space<vmem>>, vector<1x8x32xf32>
    %1 = vector.shape_cast %0 : vector<1x8x32xf32> to vector<8x32xf32>
    %c0_2 = arith.constant 0 : index
    %c0_3 = arith.constant 0 : index
    %c0_4 = arith.constant 0 : index
    %2 = vector.load %arg3[%c0_2, %c0_3, %c0_4] : memref<1x8x32xf32, #tpu.memory_space<vmem>>, vector<1x8x32xf32>
    %3 = vector.shape_cast %2 : vector<1x8x32xf32> to vector<8x32xf32>
    %c0_5 = arith.constant 0 : index
    %c0_6 = arith.constant 0 : index
    %c0_7 = arith.constant 0 : index
    %4 = vector.load %arg4[%c0_5, %c0_6, %c0_7] : memref<1x8x32xf32, #tpu.memory_space<vmem>>, vector<1x8x32xf32>
    %5 = vector.shape_cast %4 : vector<1x8x32xf32> to vector<8x32xf32>
    %cst = arith.constant 0.176776692 : f32
    %6 = vector.broadcast %cst : f32 to vector<8x32xf32>
    %7 = arith.mulf %1, %6 : vector<8x32xf32>
    %cst_8 = arith.constant dense<0.000000e+00> : vector<8x8xf32>
    %8 = tpu.matmul %7, %3, %cst_8 {dimension_numbers = #tpu.dot_dimension_numbers<[1], [1], [0], [0], [0, 0, 1, 0], [], []>} : vector<8x32xf32>, vector<8x32xf32>, vector<8x8xf32> -> vector<8x8xf32>
    %cst_9 = arith.constant dense<0xFF800000> : vector<8xf32>
    %9 = vector.multi_reduction <maximumf>, %8, %cst_9 [1] : vector<8x8xf32> to vector<8xf32>
    %10 = vector.shape_cast %9 : vector<8xf32> to vector<8x1xf32>
    %11 = vector.broadcast %10 : vector<8x1xf32> to vector<8x8xf32>
    %12 = arith.subf %8, %11 : vector<8x8xf32>
    %13 = math.exp %12 : vector<8x8xf32>
    %cst_10 = arith.constant dense<0.000000e+00> : vector<8xf32>
    %14 = vector.multi_reduction <add>, %13, %cst_10 [1] : vector<8x8xf32> to vector<8xf32>
    %15 = vector.shape_cast %14 : vector<8xf32> to vector<8x1xf32>
    %16 = math.log %15 : vector<8x1xf32>
    %17 = tpu.reciprocal %15 : vector<8x1xf32> -> vector<8x1xf32>
    %18 = vector.broadcast %17 : vector<8x1xf32> to vector<8x8xf32>
    %19 = arith.mulf %13, %18 : vector<8x8xf32>
    %20 = vector.broadcast %16 : vector<8x1xf32> to vector<8x8xf32>
    %21 = arith.subf %12, %20 : vector<8x8xf32>
    %cst_11 = arith.constant dense<0.000000e+00> : vector<8x32xf32>
    %22 = tpu.matmul %19, %5, %cst_11 {dimension_numbers = #tpu.dot_dimension_numbers<[1], [0], [0], [1], [0, 0, 1, 1], [], []>} : vector<8x8xf32>, vector<8x32xf32>, vector<8x32xf32> -> vector<8x32xf32>
    %c0_12 = arith.constant 0 : index
    %c0_13 = arith.constant 0 : index
    %c0_14 = arith.constant 0 : index
    %23 = vector.load %arg5[%c0_12, %c0_13, %c0_14] : memref<1x8x32xf32, #tpu.memory_space<vmem>>, vector<1x8x32xf32>
    %24 = vector.shape_cast %23 : vector<1x8x32xf32> to vector<8x32xf32>
    %25 = vector.shape_cast %22 : vector<8x32xf32> to vector<1x8x32xf32>
    tpu.vector_store %arg5[%c0_12, %c0_13, %c0_14], %25 {strides = array<i32>} : memref<1x8x32xf32, #tpu.memory_space<vmem>>, vector<1x8x32xf32>,
    %c0_15 = arith.constant 0 : index
    %c0_16 = arith.constant 0 : index
    %c0_17 = arith.constant 0 : index
    %26 = vector.load %arg6[%c0_15, %c0_16, %c0_17] : memref<1x8x8xf32, #tpu.memory_space<vmem>>, vector<1x8x8xf32>
    %27 = vector.shape_cast %26 : vector<1x8x8xf32> to vector<8x8xf32>
    %28 = vector.shape_cast %19 : vector<8x8xf32> to vector<1x8x8xf32>
    tpu.vector_store %arg6[%c0_15, %c0_16, %c0_17], %28 {strides = array<i32>} : memref<1x8x8xf32, #tpu.memory_space<vmem>>, vector<1x8x8xf32>,
    %c0_18 = arith.constant 0 : index
    %c0_19 = arith.constant 0 : index
    %c0_20 = arith.constant 0 : index
    %29 = vector.load %arg7[%c0_18, %c0_19, %c0_20] : memref<1x8x8xf32, #tpu.memory_space<vmem>>, vector<1x8x8xf32>
    %30 = vector.shape_cast %29 : vector<1x8x8xf32> to vector<8x8xf32>
    %31 = vector.shape_cast %21 : vector<8x8xf32> to vector<1x8x8xf32>
    tpu.vector_store %arg7[%c0_18, %c0_19, %c0_20], %31 {strides = array<i32>} : memref<1x8x8xf32, #tpu.memory_space<vmem>>, vector<1x8x8xf32>,
    return
  }
  func.func @transform_0(%arg0: i32, %arg1: i32) -> (i32, i32, i32) {
    %c0_i32 = arith.constant 0 : i32
    %c0_i32_0 = arith.constant 0 : i32
    return %arg0, %arg1, %c0_i32 : i32, i32, i32
  }
  func.func @transform_1(%arg0: i32, %arg1: i32) -> (i32, i32, i32) {
    %c0_i32 = arith.constant 0 : i32
    %c0_i32_0 = arith.constant 0 : i32
    %c0_i32_1 = arith.constant 0 : i32
    return %arg0, %c0_i32, %c0_i32_0 : i32, i32, i32
  }
  func.func @transform_2(%arg0: i32, %arg1: i32) -> (i32, i32, i32) {
    %c0_i32 = arith.constant 0 : i32
    %c0_i32_0 = arith.constant 0 : i32
    %c0_i32_1 = arith.constant 0 : i32
    return %arg0, %c0_i32, %c0_i32_0 : i32, i32, i32
  }
  func.func @transform_3(%arg0: i32, %arg1: i32) -> (i32, i32, i32) {
    %c0_i32 = arith.constant 0 : i32
    %c0_i32_0 = arith.constant 0 : i32
    return %arg0, %arg1, %c0_i32 : i32, i32, i32
  }
  func.func @transform_4(%arg0: i32, %arg1: i32) -> (i32, i32, i32) {
    %c0_i32 = arith.constant 0 : i32
    %c0_i32_0 = arith.constant 0 : i32
    return %arg0, %arg1, %c0_i32 : i32, i32, i32
  }
  func.func @transform_5(%arg0: i32, %arg1: i32) -> (i32, i32, i32) {
    %c0_i32 = arith.constant 0 : i32
    %c0_i32_0 = arith.constant 0 : i32
    return %arg0, %arg1, %c0_i32 : i32, i32, i32
  }
}

</mosaic_0001>

<llo_original>
// kernel: tpu_custom_call.1
$region0: #{tpu_custom_call.1}
  #allocation0 [shape = 'u32[]', space=smem, size = 0x4, offset = 0x4, fixed_abs, tag = 'smem constant byte address 0x4 - core index']
  #allocation1 [shape = 'u32[144,128]{1,0:T(1,128)}', space=vmem, size = 0x12000, scoped, tag = 'internal scratch']
  %s0 = inlined_call_operand.hbm [shape: f32[2,8,32], index: 0, kind: input, shape index: {}]
  %s1 = inlined_call_operand.hbm [shape: f32[2,8,32], index: 1, kind: input, shape index: {}]
  %s2 = inlined_call_operand.hbm [shape: f32[2,8,32], index: 2, kind: input, shape index: {}]
  %s3 = inlined_call_operand.hbm [shape: f32[2,8,32], index: 3, kind: output, shape index: {0}]
  %s4 = inlined_call_operand.hbm [shape: f32[2,8,8], index: 4, kind: output, shape index: {1}]
  %s5 = inlined_call_operand.hbm [shape: f32[2,8,8], index: 5, kind: output, shape index: {2}]
  %6 = xla_tuple %s3, %s4, %s5
  %s7 = sld [smem:[#allocation0]]
  $region73: #{tpu_custom_call.1} parent=0
    _
  %s9 = ssub.s32 1, %s7
  %s10 = scalar_select 0, %s9, %s7
  $region1: #{tpu_custom_call.1} parent=0
    #allocation2 [shape = 'u8[8192]{0}', space=vmem, size = 0x2000, scoped, tag = 'input window, operand 0']
    #allocation3 [shape = 's32[2]{0}', space=sflag, size = 0x8, scoped, tag = 'scoped memory for tpu_custom_call.1']
    #allocation4 [shape = 's32[2]{0}', space=sflag, size = 0x8, scoped, tag = 'scoped memory for tpu_custom_call.1']
    #allocation5 [shape = 'u8[8192]{0}', space=vmem, size = 0x2000, scoped, tag = 'input window, operand 1']
    #allocation6 [shape = 's32[2]{0}', space=sflag, size = 0x8, scoped, tag = 'scoped memory for tpu_custom_call.1']
    #allocation7 [shape = 'u8[8192]{0}', space=vmem, size = 0x2000, scoped, tag = 'input window, operand 2']
    #allocation8 [shape = 'u8[8192]{0}', space=vmem, size = 0x2000, scoped, tag = 'output window, operand 0']
    #allocation9 [shape = 'u8[8192]{0}', space=vmem, size = 0x2000, scoped, tag = 'output window, operand 1']
    #allocation10 [shape = 's32[2]{0}', space=sflag, size = 0x8, scoped, tag = 'scoped memory for tpu_custom_call.1']
    #allocation11 [shape = 'u8[8192]{0}', space=vmem, size = 0x2000, scoped, tag = 'output window, operand 2']
    %11 = vsyncpa [#allocation3], 0
    %s12 = scalar_lea.sflag [#allocation3], 1
    %13 = vsyncpa %s12, 0
    %14 = vsyncpa [#allocation6], 0
    %s15 = scalar_lea.sflag [#allocation6], 1
    %16 = vsyncpa %s15, 0
    %17 = vsyncpa [#allocation4], 0
    %s18 = scalar_lea.sflag [#allocation4], 1
    %19 = vsyncpa %s18, 0
    %20 = vsyncpa [#allocation10], 0
    %s21 = scalar_lea.sflag [#allocation10], 1
    %22 = vsyncpa %s21, 0
    loop: start=0, step=1, limit=4
    $region2: #{tpu_custom_call.1} parent=1 // loop_pre_header
      _
    $region3: #{tpu_custom_call.1} parent=1 // loop_header
      %s24 = sphi 0, %s28
      %p25 = scmp.ge.s32.totalorder %s24, 4
      %s31 = sphi 0, %s43
      %s32 = sphi 0, %s39
      %s33 = sphi 0, %s31
      %s34 = sphi 0, %s32
      %s35 = sphi 0, %s33
      %s36 = sphi 0, %s34
      %s48 = sphi 0, %s50
      %s51 = sphi 0, %s48
      %s52 = sphi 0, %s51
      %s68 = sphi 0, %s52
      %s74 = sphi 0, %s76
      %s77 = sphi 0, %s74
      %s78 = sphi 0, %s77
      %s94 = sphi 0, %s78
      %s100 = sphi 0, %s102
      %s103 = sphi 0, %s100
      %s104 = sphi 0, %s103
      %s120 = sphi 0, %s104
      %s128 = sphi 0, %s130
      %s131 = sphi 0, %s128
      %s132 = sphi 0, %s131
      %s148 = sphi 0, %s132
      %s156 = sphi 0, %s158
      %s159 = sphi 0, %s156
      %s160 = sphi 0, %s159
      %s176 = sphi 0, %s160
      %s184 = sphi 0, %s186
      %s187 = sphi 0, %s184
      %s188 = sphi 0, %s187
      %s204 = sphi 0, %s188
    $region4: #{tpu_custom_call.1} parent=1 // loop_header_branch
      %27 = sbr.rel (%p25) target = $region8
    $region5: #{tpu_custom_call.1} parent=1 // loop_body
      %s29 = ssub.s32 %s24, 1
      %s30 = ssub.s32 %s24, 2
      %s37 = sadd.s32 1, %s32
      %p38 = scmp.ge.s32.totalorder %s37, 1
      %s39 = scalar_select %p38, 0, %s37
      %s40 = sadd.s32 1, %s31
      %s41 = scalar_select %p38, %s40, %s31
      %p42 = scmp.ge.s32.totalorder %s41, 2
      %s43 = scalar_select %p42, 0, %s41
      %s44 = ssub.s32 %s31, %s43
      %s45 = ssub.s32 %s32, %s39
      %s46 = sor.u32 %s44, %s45
      %p47 = scmp.eq.s32.totalorder %s46, 0
      %s49 = sadd.s32 %s48, 1
      %s50 = scalar_select %p47, %s48, %s49
      %p53 = pneg %p47
      %p54 = scmp.eq.s32.totalorder %s24, 1
      %p55 = por %p53, %p54
      %p56 = scmp.ne.s32.totalorder %s48, %s51
      %p57 = scmp.eq.s32.totalorder %s24, 0
      %p58 = por %p56, %p57
      %p59 = scmp.ne.s32.totalorder %s48, %s51
      %p60 = scmp.eq.s32.totalorder %s29, 1
      %p61 = por %p59, %p60
      %p62 = scmp.ne.s32.totalorder %s51, %s52
      %p63 = scmp.eq.s32.totalorder %s29, 0
      %p64 = por %p62, %p63
      %p65 = scmp.ne.s32.totalorder %s51, %s52
      %p66 = scmp.eq.s32.totalorder %s30, 1
      %p67 = por %p65, %p66
      %p69 = scmp.ne.s32.totalorder %s52, %s68
      %p70 = scmp.eq.s32.totalorder %s30, 0
      %p71 = por %p69, %p70
      %s72 = ssub.s32 %s31, %s43
      %p73 = scmp.eq.s32.totalorder %s72, 0
      %s75 = sadd.s32 %s74, 1
      %s76 = scalar_select %p73, %s74, %s75
      %p79 = pneg %p73
      %p80 = scmp.eq.s32.totalorder %s24, 1
      %p81 = por %p79, %p80
      %p82 = scmp.ne.s32.totalorder %s74, %s77
      %p83 = scmp.eq.s32.totalorder %s24, 0
      %p84 = por %p82, %p83
      %p85 = scmp.ne.s32.totalorder %s74, %s77
      %p86 = scmp.eq.s32.totalorder %s29, 1
      %p87 = por %p85, %p86
      %p88 = scmp.ne.s32.totalorder %s77, %s78
      %p89 = scmp.eq.s32.totalorder %s29, 0
      %p90 = por %p88, %p89
      %p91 = scmp.ne.s32.totalorder %s77, %s78
      %p92 = scmp.eq.s32.totalorder %s30, 1
      %p93 = por %p91, %p92
      %p95 = scmp.ne.s32.totalorder %s78, %s94
      %p96 = scmp.eq.s32.totalorder %s30, 0
      %p97 = por %p95, %p96
      %s98 = ssub.s32 %s31, %s43
      %p99 = scmp.eq.s32.totalorder %s98, 0
      %s101 = sadd.s32 %s100, 1
      %s102 = scalar_select %p99, %s100, %s101
      %p105 = pneg %p99
      %p106 = scmp.eq.s32.totalorder %s24, 1
      %p107 = por %p105, %p106
      %p108 = scmp.ne.s32.totalorder %s100, %s103
      %p109 = scmp.eq.s32.totalorder %s24, 0
      %p110 = por %p108, %p109
      %p111 = scmp.ne.s32.totalorder %s100, %s103
      %p112 = scmp.eq.s32.totalorder %s29, 1
      %p113 = por %p111, %p112
      %p114 = scmp.ne.s32.totalorder %s103, %s104
      %p115 = scmp.eq.s32.totalorder %s29, 0
      %p116 = por %p114, %p115
      %p117 = scmp.ne.s32.totalorder %s103, %s104
      %p118 = scmp.eq.s32.totalorder %s30, 1
      %p119 = por %p117, %p118
      %p121 = scmp.ne.s32.totalorder %s104, %s120
      %p122 = scmp.eq.s32.totalorder %s30, 0
      %p123 = por %p121, %p122
      %s124 = ssub.s32 %s31, %s43
      %s125 = ssub.s32 %s32, %s39
      %s126 = sor.u32 %s124, %s125
      %p127 = scmp.eq.s32.totalorder %s126, 0
      %s129 = sadd.s32 %s128, 1
      %s130 = scalar_select %p127, %s128, %s129
      %p133 = pneg %p127
      %p134 = scmp.eq.s32.totalorder %s24, 1
      %p135 = por %p133, %p134
      %p136 = scmp.ne.s32.totalorder %s128, %s131
      %p137 = scmp.eq.s32.totalorder %s24, 0
      %p138 = por %p136, %p137
      %p139 = scmp.ne.s32.totalorder %s128, %s131
      %p140 = scmp.eq.s32.totalorder %s29, 1
      %p141 = por %p139, %p140
      %p142 = scmp.ne.s32.totalorder %s131, %s132
      %p143 = scmp.eq.s32.totalorder %s29, 0
      %p144 = por %p142, %p143
      %p145 = scmp.ne.s32.totalorder %s131, %s132
      %p146 = scmp.eq.s32.totalorder %s30, 1
      %p147 = por %p145, %p146
      %p149 = scmp.ne.s32.totalorder %s132, %s148
      %p150 = scmp.eq.s32.totalorder %s30, 0
      %p151 = por %p149, %p150
      %s152 = ssub.s32 %s31, %s43
      %s153 = ssub.s32 %s32, %s39
      %s154 = sor.u32 %s152, %s153
      %p155 = scmp.eq.s32.totalorder %s154, 0
      %s157 = sadd.s32 %s156, 1
      %s158 = scalar_select %p155, %s156, %s157
      %p161 = pneg %p155
      %p162 = scmp.eq.s32.totalorder %s24, 1
      %p163 = por %p161, %p162
      %p164 = scmp.ne.s32.totalorder %s156, %s159
      %p165 = scmp.eq.s32.totalorder %s24, 0
      %p166 = por %p164, %p165
      %p167 = scmp.ne.s32.totalorder %s156, %s159
      %p168 = scmp.eq.s32.totalorder %s29, 1
      %p169 = por %p167, %p168
      %p170 = scmp.ne.s32.totalorder %s159, %s160
      %p171 = scmp.eq.s32.totalorder %s29, 0
      %p172 = por %p170, %p171
      %p173 = scmp.ne.s32.totalorder %s159, %s160
      %p174 = scmp.eq.s32.totalorder %s30, 1
      %p175 = por %p173, %p174
      %p177 = scmp.ne.s32.totalorder %s160, %s176
      %p178 = scmp.eq.s32.totalorder %s30, 0
      %p179 = por %p177, %p178
      %s180 = ssub.s32 %s31, %s43
      %s181 = ssub.s32 %s32, %s39
      %s182 = sor.u32 %s180, %s181
      %p183 = scmp.eq.s32.totalorder %s182, 0
      %s185 = sadd.s32 %s184, 1
      %s186 = scalar_select %p183, %s184, %s185
      %p189 = pneg %p183
      %p190 = scmp.eq.s32.totalorder %s24, 1
      %p191 = por %p189, %p190
      %p192 = scmp.ne.s32.totalorder %s184, %s187
      %p193 = scmp.eq.s32.totalorder %s24, 0
      %p194 = por %p192, %p193
      %p195 = scmp.ne.s32.totalorder %s184, %s187
      %p196 = scmp.eq.s32.totalorder %s29, 1
      %p197 = por %p195, %p196
      %p198 = scmp.ne.s32.totalorder %s187, %s188
      %p199 = scmp.eq.s32.totalorder %s29, 0
      %p200 = por %p198, %p199
      %p201 = scmp.ne.s32.totalorder %s187, %s188
      %p202 = scmp.eq.s32.totalorder %s30, 1
      %p203 = por %p201, %p202
      %p205 = scmp.ne.s32.totalorder %s188, %s204
      %p206 = scmp.eq.s32.totalorder %s30, 0
      %p207 = por %p205, %p206
      %p208 = scmp.le.s32.totalorder 1, %s24
      %p209 = scmp.lt.s32.totalorder %s24, 3
      %p210 = pnand %p208, %p209
      %p211 = pneg %p210
      // Predicated region
      $region9: #{tpu_custom_call.1} parent=5 // pred_check
        _
      $region10: #{tpu_custom_call.1} parent=5 // pred_check_branch
        %213 = sbr.rel (%p210) target = $region12
      $region11: #{tpu_custom_call.1} parent=5 // pred_region
        %s214 = ssub.s32 %s24, 1
      $region12: #{tpu_custom_call.1} parent=5 // pred_fallthru
        _
      %p215 = scmp.lt.s32.totalorder %s24, 2
      // Predicated region
      $region13: #{tpu_custom_call.1} parent=5 // pred_check
        %p216 = pneg %p215
      $region14: #{tpu_custom_call.1} parent=5 // pred_check_branch
        %218 = sbr.rel (%p216) target = $region16
      $region15: #{tpu_custom_call.1} parent=5 // pred_region
        // Predicated region
        $region17: #{tpu_custom_call.1} parent=15 // pred_check
          %p219 = pneg %p58
        $region18: #{tpu_custom_call.1} parent=15 // pred_check_branch
          %221 = sbr.rel (%p219) target = $region20
        $region19: #{tpu_custom_call.1} parent=15 // pred_region
          %s222 = sand.u32 %s48, 1
          %s223 = scalar_lea.sflag [#allocation3], %s222
          %s224 = sand.u32 %s48, 1
          %s225 = smul.addr %s224, 8
          %s226 = scalar_lea.vmem [#allocation2], %s225
          %s228 = ssub.s32 128, 128
          %229 = vsyncadd %s223, %s228
          %s230 = sadd.s32 %s32, %s31
          %s231 = smul.addr %s230, 128
          %s232 = scalar_lea.hbm %s0, %s231
          %s234 = sshll.u32 %s226, 4
          %s235 = int_to_ptr.vmem [resolvable:$true] %s234
          %237 = dma.hbm_to_vmem [thread:$0]  %s232, 128, %s235, %s223
        $region20: #{tpu_custom_call.1} parent=15 // pred_fallthru
          _
        // Predicated region
        $region21: #{tpu_custom_call.1} parent=15 // pred_check
          %p238 = pneg %p84
        $region22: #{tpu_custom_call.1} parent=15 // pred_check_branch
          %240 = sbr.rel (%p238) target = $region24
        $region23: #{tpu_custom_call.1} parent=15 // pred_region
          %s241 = sand.u32 %s24, 1
          %s242 = scalar_lea.sflag [#allocation6], %s241
          %s243 = sand.u32 %s74, 1
          %s244 = smul.addr %s243, 8
          %s245 = scalar_lea.vmem [#allocation5], %s244
          %s247 = ssub.s32 128, 128
          %248 = vsyncadd %s242, %s247
          %s249 = smul.addr %s31, 128
          %s250 = scalar_lea.hbm %s1, %s249
          %s252 = sshll.u32 %s245, 4
          %s253 = int_to_ptr.vmem [resolvable:$true] %s252
          %255 = dma.hbm_to_vmem [thread:$0]  %s250, 128, %s253, %s242
        $region24: #{tpu_custom_call.1} parent=15 // pred_fallthru
          _
        // Predicated region
        $region25: #{tpu_custom_call.1} parent=15 // pred_check
          %p256 = pneg %p110
        $region26: #{tpu_custom_call.1} parent=15 // pred_check_branch
          %258 = sbr.rel (%p256) target = $region28
        $region27: #{tpu_custom_call.1} parent=15 // pred_region
          %s259 = sand.u32 %s24, 1
          %s260 = scalar_lea.sflag [#allocation6], %s259
          %s261 = sand.u32 %s100, 1
          %s262 = smul.addr %s261, 8
          %s263 = scalar_lea.vmem [#allocation7], %s262
          %s265 = ssub.s32 128, 128
          %266 = vsyncadd %s260, %s265
          %s267 = smul.addr %s31, 128
          %s268 = scalar_lea.hbm %s2, %s267
          %s270 = sshll.u32 %s263, 4
          %s271 = int_to_ptr.vmem [resolvable:$true] %s270
          %273 = dma.hbm_to_vmem [thread:$0]  %s268, 128, %s271, %s260
        $region28: #{tpu_custom_call.1} parent=15 // pred_fallthru
          _
      $region16: #{tpu_custom_call.1} parent=5 // pred_fallthru
        _
      %p274 = scmp.le.s32.totalorder 1, %s24
      %p275 = scmp.lt.s32.totalorder %s24, 3
      %p276 = pnand %p274, %p275
      %p277 = pneg %p276
      // Predicated region
      $region29: #{tpu_custom_call.1} parent=5 // pred_check
        _
      $region30: #{tpu_custom_call.1} parent=5 // pred_check_branch
        %279 = sbr.rel (%p276) target = $region32
      $region31: #{tpu_custom_call.1} parent=5 // pred_region
        %s280 = ssub.s32 %s24, 1
        %s281 = sand.u32 %s51, 1
        %s282 = scalar_lea.sflag [#allocation3], %s281
        %s283 = sand.u32 %s51, 1
        %s284 = smul.addr %s283, 8
        %s285 = scalar_lea.vmem [#allocation2], %s284
        // Predicated region
        $region33: #{tpu_custom_call.1} parent=31 // pred_check
          %p286 = pneg %p64
        $region34: #{tpu_custom_call.1} parent=31 // pred_check_branch
          %288 = sbr.rel (%p286) target = $region36
        $region35: #{tpu_custom_call.1} parent=31 // pred_region
          %289 = dma.done %s282, 128
        $region36: #{tpu_custom_call.1} parent=31 // pred_fallthru
          _
        %s290 = sand.u32 %s29, 1
        %s291 = scalar_lea.sflag [#allocation6], %s290
        %s292 = sand.u32 %s77, 1
        %s293 = smul.addr %s292, 8
        %s294 = scalar_lea.vmem [#allocation5], %s293
        // Predicated region
        $region37: #{tpu_custom_call.1} parent=31 // pred_check
          %p295 = pneg %p90
        $region38: #{tpu_custom_call.1} parent=31 // pred_check_branch
          %297 = sbr.rel (%p295) target = $region40
        $region39: #{tpu_custom_call.1} parent=31 // pred_region
          %298 = dma.done %s291, 128
        $region40: #{tpu_custom_call.1} parent=31 // pred_fallthru
          _
        %s299 = sand.u32 %s29, 1
        %s300 = scalar_lea.sflag [#allocation6], %s299
        %s301 = sand.u32 %s103, 1
        %s302 = smul.addr %s301, 8
        %s303 = scalar_lea.vmem [#allocation7], %s302
        // Predicated region
        $region41: #{tpu_custom_call.1} parent=31 // pred_check
          %p304 = pneg %p116
        $region42: #{tpu_custom_call.1} parent=31 // pred_check_branch
          %306 = sbr.rel (%p304) target = $region44
        $region43: #{tpu_custom_call.1} parent=31 // pred_region
          %307 = dma.done %s300, 128
        $region44: #{tpu_custom_call.1} parent=31 // pred_fallthru
          _
        %s308 = sand.u32 %s51, 1
        %s309 = scalar_lea.sflag [#allocation3], %s308
        %s310 = sand.u32 %s51, 1
        %s311 = smul.addr %s310, 8
        %s312 = scalar_lea.vmem [#allocation2], %s311
        %p313 = pneg %p64
        %p314 = pneg %p61
        %s315 = sand.u32 %s29, 1
        %s316 = scalar_lea.sflag [#allocation6], %s315
        %s317 = sand.u32 %s77, 1
        %s318 = smul.addr %s317, 8
        %s319 = scalar_lea.vmem [#allocation5], %s318
        %p320 = pneg %p90
        %p321 = pneg %p87
        %s322 = sand.u32 %s29, 1
        %s323 = scalar_lea.sflag [#allocation6], %s322
        %s324 = sand.u32 %s103, 1
        %s325 = smul.addr %s324, 8
        %s326 = scalar_lea.vmem [#allocation7], %s325
        %p327 = pneg %p116
        %p328 = pneg %p113
        %p329 = pneg %p144
        %p330 = pneg %p141
        %s331 = sand.u32 %s131, 1
        %s332 = scalar_lea.sflag [#allocation4], %s331
        %s333 = sand.u32 %s131, 1
        %s334 = smul.addr %s333, 8
        %s335 = scalar_lea.vmem [#allocation8], %s334
        %p336 = pneg %p172
        %p337 = pneg %p169
        %s338 = sand.u32 %s29, 1
        %s339 = scalar_lea.sflag [#allocation10], %s338
        %s340 = sand.u32 %s159, 1
        %s341 = smul.addr %s340, 8
        %s342 = scalar_lea.vmem [#allocation9], %s341
        %p343 = pneg %p200
        %p344 = pneg %p197
        %s345 = sand.u32 %s29, 1
        %s346 = scalar_lea.sflag [#allocation10], %s345
        %s347 = sand.u32 %s187, 1
        %s348 = smul.addr %s347, 8
        %s349 = scalar_lea.vmem [#allocation11], %s348
        %v350 = vld [vmem:[%s285] sm:$0xff]
        %v351 = vld [vmem:[%s294] sm:$0xff]
        %v352 = vld [vmem:[%s303] sm:$0xff]
        %v353 = vmul.f32 %v350, 0.17677669
        %vm354 = vcmask 261120
        %v356 = vsel %vm354, %v353, 0
        %v359 = vsel %vm354, %v351, 0
        %361 = vmatprep.subr.mxu0 0.0
        %362 = vmatpush1.xpose.msra.mxu0 %v359
        %363 = vmatprep.subr.mxu0 0.0
        %364 = vmatpush1.xpose.msra.mxu0 0.0
        %365 = vmatprep.subr.mxu0 0.0
        %366 = vmatpush1.xpose.msra.mxu0 0.0
        %367 = vmatprep.subr.mxu0 0.0
        %368 = vmatpush1.xpose.msra.mxu0 0.0
        %369 = vmatprep.subr.mxu0 0.0
        %370 = vmatpush1.xpose.msra.mxu0 0.0
        %371 = vmatprep.subr.mxu0 0.0
        %372 = vmatpush1.xpose.msra.mxu0 0.0
        %373 = vmatprep.subr.mxu0 0.0
        %374 = vmatpush1.xpose.msra.mxu0 0.0
        %375 = vmatprep.subr.mxu0 0.0
        %376 = vmatpush1.xpose.msra.mxu0 0.0
        %377 = vmatprep.subr.mxu0 0.0
        %378 = vmatpush1.xpose.msra.mxu0 0.0
        %379 = vmatprep.subr.mxu0 0.0
        %380 = vmatpush1.xpose.msra.mxu0 0.0
        %381 = vmatprep.subr.mxu0 0.0
        %382 = vmatpush1.xpose.msra.mxu0 0.0
        %383 = vmatprep.subr.mxu0 0.0
        %384 = vmatpush1.xpose.msra.mxu0 0.0
        %385 = vmatprep.subr.mxu0 0.0
        %386 = vmatpush1.xpose.msra.mxu0 0.0
        %387 = vmatprep.subr.mxu0 0.0
        %388 = vmatpush1.xpose.msra.mxu0 0.0
        %389 = vmatprep.subr.mxu0 0.0
        %390 = vmatpush1.xpose.msra.mxu0 0.0
        %391 = vmatprep.subr.mxu0 0.0
        %392 = vmatpush1.xpose.msra.mxu0 0.0
        %393 = vmatprep.subr.mxu0 0.0
        %394 = vmatpush1.xpose.msra.mxu0 0.0
        %395 = vmatprep.subr.mxu0 0.0
        %396 = vmatpush1.xpose.msra.mxu0 0.0
        %397 = vmatprep.subr.mxu0 0.0
        %398 = vmatpush1.xpose.msra.mxu0 0.0
        %399 = vmatprep.subr.mxu0 0.0
        %400 = vmatpush1.xpose.msra.mxu0 0.0
        %401 = vmatprep.subr.mxu0 0.0
        %402 = vmatpush1.xpose.msra.mxu0 0.0
        %403 = vmatprep.subr.mxu0 0.0
        %404 = vmatpush1.xpose.msra.mxu0 0.0
        %405 = vmatprep.subr.mxu0 0.0
        %406 = vmatpush1.xpose.msra.mxu0 0.0
        %407 = vmatprep.subr.mxu0 0.0
        %408 = vmatpush1.xpose.msra.mxu0 0.0
        %409 = vmatprep.subr.mxu0 0.0
        %410 = vmatpush1.xpose.msra.mxu0 0.0
        %411 = vmatprep.subr.mxu0 0.0
        %412 = vmatpush1.xpose.msra.mxu0 0.0
        %413 = vmatprep.subr.mxu0 0.0
        %414 = vmatpush1.xpose.msra.mxu0 0.0
        %415 = vmatprep.subr.mxu0 0.0
        %416 = vmatpush1.xpose.msra.mxu0 0.0
        %417 = vmatprep.subr.mxu0 0.0
        %418 = vmatpush1.xpose.msra.mxu0 0.0
        %419 = vmatprep.subr.mxu0 0.0
        %420 = vmatpush1.xpose.msra.mxu0 0.0
        %421 = vmatprep.subr.mxu0 0.0
        %422 = vmatpush1.xpose.msra.mxu0 0.0
        %423 = vmatprep.subr.mxu0 0.0
        %424 = vmatpush1.xpose.msra.mxu0 0.0
        %425 = vmatprep.mubr.f32.mxu0 0.0
        %426 = vmatmul.mubr.f32.gmra.mrb[0].mxu0 %v356
        %v427 = vpop.f32.mrb[0].mxu0
        %v428 = vadd.f32 0.0, %v427
        %v429 = vpop.f32.mrb[0].mxu0
        %430 = vdwg.mxu0
        %vm431 = vcmask 64512
        %v432 = vsel %vm431, %v428, -inf
        %433 = vmax.xlane.f32.xlu0 %v432
        %v434 = vpop.xlane.xlu0 %433
        %v435 = vsub.f32 %v428, %v434
        %v436 = vmul.f32 %v435, 1.442695
        %v437 = vpow.pop %v436
        %v438 = vsel %vm431, %v437, 0.0
        %439 = vadd.xlane.f32.xlu0 %v438
        %v440 = vpop.xlane.xlu0 %439
        %v441 = vlog2.pop %v440
        %v442 = vmul.f32 %v441, 0.6931472
        %v443 = vrcp.pop %v440
        %v444 = vmul.f32 %v437, %v443
        %v445 = vsub.f32 %v435, %v442
        %v447 = vsel %vm431, %v444, 0
        %449 = vmatprep.subr.mxu0 0.0
        %450 = vmatpush1.msra.mxu0 %v352
        %451 = vmatprep.subr.mxu0 0.0
        %452 = vmatpush1.msra.mxu0 0.0
        %453 = vmatprep.subr.mxu0 0.0
        %454 = vmatpush1.msra.mxu0 0.0
        %455 = vmatprep.subr.mxu0 0.0
        %456 = vmatpush1.msra.mxu0 0.0
        %457 = vmatprep.subr.mxu0 0.0
        %458 = vmatpush1.msra.mxu0 0.0
        %459 = vmatprep.subr.mxu0 0.0
        %460 = vmatpush1.msra.mxu0 0.0
        %461 = vmatprep.subr.mxu0 0.0
        %462 = vmatpush1.msra.mxu0 0.0
        %463 = vmatprep.subr.mxu0 0.0
        %464 = vmatpush1.msra.mxu0 0.0
        %465 = vmatprep.subr.mxu0 0.0
        %466 = vmatpush1.msra.mxu0 0.0
        %467 = vmatprep.subr.mxu0 0.0
        %468 = vmatpush1.msra.mxu0 0.0
        %469 = vmatprep.subr.mxu0 0.0
        %470 = vmatpush1.msra.mxu0 0.0
        %471 = vmatprep.subr.mxu0 0.0
        %472 = vmatpush1.msra.mxu0 0.0
        %473 = vmatprep.subr.mxu0 0.0
        %474 = vmatpush1.msra.mxu0 0.0
        %475 = vmatprep.subr.mxu0 0.0
        %476 = vmatpush1.msra.mxu0 0.0
        %477 = vmatprep.subr.mxu0 0.0
        %478 = vmatpush1.msra.mxu0 0.0
        %479 = vmatprep.subr.mxu0 0.0
        %480 = vmatpush1.msra.mxu0 0.0
        %481 = vmatprep.subr.mxu0 0.0
        %482 = vmatpush1.msra.mxu0 0.0
        %483 = vmatprep.subr.mxu0 0.0
        %484 = vmatpush1.msra.mxu0 0.0
        %485 = vmatprep.subr.mxu0 0.0
        %486 = vmatpush1.msra.mxu0 0.0
        %487 = vmatprep.subr.mxu0 0.0
        %488 = vmatpush1.msra.mxu0 0.0
        %489 = vmatprep.subr.mxu0 0.0
        %490 = vmatpush1.msra.mxu0 0.0
        %491 = vmatprep.subr.mxu0 0.0
        %492 = vmatpush1.msra.mxu0 0.0
        %493 = vmatprep.subr.mxu0 0.0
        %494 = vmatpush1.msra.mxu0 0.0
        %495 = vmatprep.subr.mxu0 0.0
        %496 = vmatpush1.msra.mxu0 0.0
        %497 = vmatprep.subr.mxu0 0.0
        %498 = vmatpush1.msra.mxu0 0.0
        %499 = vmatprep.subr.mxu0 0.0
        %500 = vmatpush1.msra.mxu0 0.0
        %501 = vmatprep.subr.mxu0 0.0
        %502 = vmatpush1.msra.mxu0 0.0
        %503 = vmatprep.subr.mxu0 0.0
        %504 = vmatpush1.msra.mxu0 0.0
        %505 = vmatprep.subr.mxu0 0.0
        %506 = vmatpush1.msra.mxu0 0.0
        %507 = vmatprep.subr.mxu0 0.0
        %508 = vmatpush1.msra.mxu0 0.0
        %509 = vmatprep.subr.mxu0 0.0
        %510 = vmatpush1.msra.mxu0 0.0
        %511 = vmatprep.subr.mxu0 0.0
        %512 = vmatpush1.msra.mxu0 0.0
        %513 = vmatprep.mubr.f32.mxu0 0.0
        %514 = vmatmul.mubr.f32.gmra.mrb[0].mxu0 %v447
        %v515 = vpop.f32.mrb[0].mxu0
        %v516 = vadd.f32 0.0, %v515
        %v517 = vpop.f32.mrb[0].mxu0
        %518 = vdwg.mxu0
        %519 = vst.msk [vmem:[%s335] sm:$0xff] %vm354, %v516
        %520 = vst.msk [vmem:[%s342] sm:$0xff] %vm431, %v444
        %521 = vst.msk [vmem:[%s349] sm:$0xff] %vm431, %v445
        %s522 = sand.u32 %s131, 1
        %s523 = scalar_lea.sflag [#allocation4], %s522
        %s524 = sand.u32 %s131, 1
        %s525 = smul.addr %s524, 8
        %s526 = scalar_lea.vmem [#allocation8], %s525
        %s527 = sand.u32 %s29, 1
        %s528 = scalar_lea.sflag [#allocation10], %s527
        %s529 = sand.u32 %s159, 1
        %s530 = smul.addr %s529, 8
        %s531 = scalar_lea.vmem [#allocation9], %s530
        %s532 = sand.u32 %s29, 1
        %s533 = scalar_lea.sflag [#allocation10], %s532
        %s534 = sand.u32 %s187, 1
        %s535 = smul.addr %s534, 8
        %s536 = scalar_lea.vmem [#allocation11], %s535
        // Predicated region
        $region45: #{tpu_custom_call.1} parent=31 // pred_check
          %p537 = pneg %p141
        $region46: #{tpu_custom_call.1} parent=31 // pred_check_branch
          %539 = sbr.rel (%p537) target = $region48
        $region47: #{tpu_custom_call.1} parent=31 // pred_region
          %s541 = ssub.s32 128, 128
          %542 = vsyncadd %s523, %s541
          %s543 = sadd.s32 %s34, %s33
          %s544 = smul.addr %s543, 128
          %s545 = scalar_lea.hbm %s3, %s544
          %s547 = sshll.u32 %s526, 4
          %s548 = int_to_ptr.vmem [resolvable:$true] %s547
          %550 = dma.vmem_to_hbm [thread:$0]  %s548, 128, %s545, %s523
        $region48: #{tpu_custom_call.1} parent=31 // pred_fallthru
          _
        // Predicated region
        $region49: #{tpu_custom_call.1} parent=31 // pred_check
          %p551 = pneg %p169
        $region50: #{tpu_custom_call.1} parent=31 // pred_check_branch
          %553 = sbr.rel (%p551) target = $region52
        $region51: #{tpu_custom_call.1} parent=31 // pred_region
          %s555 = ssub.s32 128, 128
          %556 = vsyncadd %s528, %s555
          %s557 = sadd.s32 %s34, %s33
          %s558 = smul.addr %s557, 128
          %s559 = scalar_lea.hbm %s4, %s558
          %s561 = sshll.u32 %s531, 4
          %s562 = int_to_ptr.vmem [resolvable:$true] %s561
          %564 = dma.vmem_to_hbm [thread:$0]  %s562, 128, %s559, %s528
        $region52: #{tpu_custom_call.1} parent=31 // pred_fallthru
          _
        // Predicated region
        $region53: #{tpu_custom_call.1} parent=31 // pred_check
          %p565 = pneg %p197
        $region54: #{tpu_custom_call.1} parent=31 // pred_check_branch
          %567 = sbr.rel (%p565) target = $region56
        $region55: #{tpu_custom_call.1} parent=31 // pred_region
          %s569 = ssub.s32 128, 128
          %570 = vsyncadd %s533, %s569
          %s571 = sadd.s32 %s34, %s33
          %s572 = smul.addr %s571, 128
          %s573 = scalar_lea.hbm %s5, %s572
          %s575 = sshll.u32 %s536, 4
          %s576 = int_to_ptr.vmem [resolvable:$true] %s575
          %578 = dma.vmem_to_hbm [thread:$0]  %s576, 128, %s573, %s533
        $region56: #{tpu_custom_call.1} parent=31 // pred_fallthru
          _
      $region32: #{tpu_custom_call.1} parent=5 // pred_fallthru
        _
      %p579 = scmp.le.s32.totalorder 2, %s24
      // Predicated region
      $region57: #{tpu_custom_call.1} parent=5 // pred_check
        %p580 = pneg %p579
      $region58: #{tpu_custom_call.1} parent=5 // pred_check_branch
        %582 = sbr.rel (%p580) target = $region60
      $region59: #{tpu_custom_call.1} parent=5 // pred_region
        %s583 = ssub.s32 %s24, 2
        // Predicated region
        $region61: #{tpu_custom_call.1} parent=59 // pred_check
          %p584 = pneg %p147
        $region62: #{tpu_custom_call.1} parent=59 // pred_check_branch
          %586 = sbr.rel (%p584) target = $region64
        $region63: #{tpu_custom_call.1} parent=59 // pred_region
          %s587 = sand.u32 %s132, 1
          %s588 = scalar_lea.sflag [#allocation4], %s587
          %s589 = sand.u32 %s132, 1
          %s590 = smul.addr %s589, 8
          %s591 = scalar_lea.vmem [#allocation8], %s590
          %592 = dma.done %s588, 128
        $region64: #{tpu_custom_call.1} parent=59 // pred_fallthru
          _
        // Predicated region
        $region65: #{tpu_custom_call.1} parent=59 // pred_check
          %p593 = pneg %p175
        $region66: #{tpu_custom_call.1} parent=59 // pred_check_branch
          %595 = sbr.rel (%p593) target = $region68
        $region67: #{tpu_custom_call.1} parent=59 // pred_region
          %s596 = sand.u32 %s30, 1
          %s597 = scalar_lea.sflag [#allocation10], %s596
          %s598 = sand.u32 %s160, 1
          %s599 = smul.addr %s598, 8
          %s600 = scalar_lea.vmem [#allocation9], %s599
          %601 = dma.done %s597, 128
        $region68: #{tpu_custom_call.1} parent=59 // pred_fallthru
          _
        // Predicated region
        $region69: #{tpu_custom_call.1} parent=59 // pred_check
          %p602 = pneg %p203
        $region70: #{tpu_custom_call.1} parent=59 // pred_check_branch
          %604 = sbr.rel (%p602) target = $region72
        $region71: #{tpu_custom_call.1} parent=59 // pred_region
          %s605 = sand.u32 %s30, 1
          %s606 = scalar_lea.sflag [#allocation10], %s605
          %s607 = sand.u32 %s188, 1
          %s608 = smul.addr %s607, 8
          %s609 = scalar_lea.vmem [#allocation11], %s608
          %610 = dma.done %s606, 128
        $region72: #{tpu_custom_call.1} parent=59 // pred_fallthru
          _
      $region60: #{tpu_custom_call.1} parent=5 // pred_fallthru
        _
    $region6: #{tpu_custom_call.1} parent=1 // loop_footer
      %s28 = sadd.s32 1, %s24
    $region7: #{tpu_custom_call.1} parent=1 // loop_footer_branch
      %23 = sbr.rel target = $region3
    $region8: #{tpu_custom_call.1} parent=1 // loop_exit
      _
    %611 = vsyncpa [#allocation3], 1
    %s612 = scalar_lea.sflag [#allocation3], 1
    %613 = vsyncpa %s612, 1
    %614 = vsyncpa [#allocation6], 1
    %s615 = scalar_lea.sflag [#allocation6], 1
    %616 = vsyncpa %s615, 1
    %617 = vsyncpa [#allocation4], 1
    %s618 = scalar_lea.sflag [#allocation4], 1
    %619 = vsyncpa %s618, 1
    %620 = vsyncpa [#allocation10], 1
    %s621 = scalar_lea.sflag [#allocation10], 1
    %622 = vsyncpa %s621, 1

</llo_original>
